<compile_context>
chip_gen: v7x
topology: tpu7x:2x2x1
jax: 0.10.0
libtpu: 0.0.40
codegen_flags: <defaults>
</compile_context>

<pallas_src>
import jax
import jax.numpy as jnp
import numpy as np
from jax.experimental import pallas as pl
from jax.experimental.pallas import tpu as pltpu

HIDDEN = 256


def soft_q_kernel(x_ref, w1_ref, b1_ref, w2_ref, b2_ref, wq_ref, bq_ref, out_ref):
    # fc1 + relu: bf16 MXU operands, f32 accumulation; bias/ReLU in f32.
    h1 = jnp.dot(x_ref[...], w1_ref[...], preferred_element_type=jnp.float32)
    h1 = jnp.maximum(h1 + b1_ref[...], 0.0)            # b1: (1, HIDDEN) broadcasts
    # fc2 + relu: re-cast the f32 activations to bf16 for the MXU.
    h2 = jnp.dot(h1.astype(jnp.bfloat16), w2_ref[...],
                 preferred_element_type=jnp.float32)
    h2 = jnp.maximum(h2 + b2_ref[...], 0.0)
    # fc_q (256 -> 1): f32 VPU multiply + XLU lane-reduce; bq scalar from SMEM.
    q = jnp.sum(h2 * wq_ref[...], axis=-1, keepdims=True) + bq_ref[0, 0]  # (tile_b, 1)
    # Lane-dense store: relayout the (tile_b, 1) column into a (1, tile_b) row
    # so the writeback is an unmasked vst instead of masked partial stores.
    out_ref[...] = q.T.astype(out_ref.dtype)


def _round_up(x, m):
    return ((x + m - 1) // m) * m


def _cdiv(a, b):
    return -(-a // b)


def _choose_tiling(batch, tile_b_max):
    """Balanced batch tiles; >=2 grid steps for large batches (v7x megacore)."""
    n_tiles = max(1, _cdiv(batch, tile_b_max))
    if n_tiles == 1 and batch >= 256:
        n_tiles = 2          # let ("parallel",) shard across v7x's two TensorCores
    if n_tiles == 1:
        tile_b = _round_up(batch, 8)
    else:
        # Multi-step grids need tile_b % 128 == 0 so the (1, tile_b) output
        # block stays lane-aligned (also keeps the bf16 x block sublane-packed).
        tile_b = _round_up(_cdiv(batch, n_tiles), 128)
        n_tiles = _cdiv(batch, tile_b)
    return n_tiles, tile_b


def soft_q_forward(x, w1, b1, w2, b2, wq, bq, *, tile_b_max=1024):
    """q = fc_q(relu(fc2(relu(fc1(x))))).

    x:  (B, input_dim) f32
    w1: (input_dim, HIDDEN), b1: (1, HIDDEN)
    w2: (HIDDEN, HIDDEN),    b2: (1, HIDDEN)
    wq: (1, HIDDEN),         bq: (1, 1)
    returns (B, 1) f32
    """
    B, in_dim = x.shape

    n_tiles, tile_b = _choose_tiling(B, tile_b_max)
    b_pad = n_tiles * tile_b
    if b_pad != B:
        x = jnp.pad(x, ((0, b_pad - B), (0, 0)))

    # bf16 operands for the MXU (accumulation stays f32 in-kernel). Biases, wq
    # and bq stay f32 so the VPU path is f32 everywhere (v5e VPU has no bf16).
    x_bf = x.astype(jnp.bfloat16)
    w1_bf = w1.astype(jnp.bfloat16)
    w2_bf = w2.astype(jnp.bfloat16)

    flops = 2 * b_pad * HIDDEN * (in_dim + HIDDEN + 1)
    bytes_accessed = (
        b_pad * in_dim * 2                              # x stream (bf16)
        + (in_dim * HIDDEN + HIDDEN * HIDDEN) * 2       # w1, w2 (bf16, resident)
        + (3 * HIDDEN + 1) * 4                          # b1, b2, wq, bq (f32)
        + b_pad * 4                                     # q out (f32)
    )

    out = pl.pallas_call(
        soft_q_kernel,
        out_shape=jax.ShapeDtypeStruct((1, b_pad), jnp.float32),
        grid_spec=pltpu.PrefetchScalarGridSpec(
            num_scalar_prefetch=0,
            grid=(n_tiles,),
            in_specs=[
                # x streams over the batch grid (double-buffered by Pallas).
                pl.BlockSpec((tile_b, in_dim), lambda i: (i, 0)),
                # Weights / biases: constant block index -> stay VMEM-resident.
                # (Single-buffering these constant blocks would save ~0.15 MB
                #  of VMEM; left at the default to keep compile risk zero —
                #  VMEM is nowhere near the limit at these sizes.)
                pl.BlockSpec((in_dim, HIDDEN), lambda i: (0, 0)),
                pl.BlockSpec((1, HIDDEN), lambda i: (0, 0)),
                pl.BlockSpec((HIDDEN, HIDDEN), lambda i: (0, 0)),
                pl.BlockSpec((1, HIDDEN), lambda i: (0, 0)),
                pl.BlockSpec((1, HIDDEN), lambda i: (0, 0)),
                # bq: scalar in SMEM (no padded VMEM tile for a single value).
                pl.BlockSpec(memory_space=pltpu.SMEM),
            ],
            out_specs=pl.BlockSpec((1, tile_b), lambda i: (0, i)),
        ),
        compiler_params=pltpu.CompilerParams(
            dimension_semantics=("parallel",),      # megacore sharding on v7x
            vmem_limit_bytes=32 * 1024 * 1024,      # portable across v5e/v6e/v7x
        ),
        cost_estimate=pl.CostEstimate(
            flops=flops, transcendentals=0, bytes_accessed=bytes_accessed),
    )(x_bf, w1_bf, b1, w2_bf, b2, wq, bq)

    return out[0, :B].reshape(B, 1)


def xavier_uniform(key, shape, fan_in, fan_out):
    # matches torch.nn.init.xavier_uniform_ (gain=1)
    limit = float(np.sqrt(6.0 / (fan_in + fan_out)))
    return jax.random.uniform(key, shape, jnp.float32, -limit, limit)


if __name__ == "__main__":
    # Small, MuJoCo-like shapes: obs_dim=12, act_dim=4 -> input_dim=16, batch=8
    obs_dim, act_dim, batch = 12, 4, 8
    input_dim = obs_dim + act_dim

    key = jax.random.PRNGKey(0)
    k_x, k1, k2, k3 = jax.random.split(key, 4)

    x = jax.random.normal(k_x, (batch, input_dim), jnp.float32)

    # Weights stored as (in, out) so y = x @ W; wq stored as a (1, HIDDEN) row.
    w1 = xavier_uniform(k1, (input_dim, HIDDEN), input_dim, HIDDEN)
    b1 = jnp.full((1, HIDDEN), 0.1, jnp.float32)
    w2 = xavier_uniform(k2, (HIDDEN, HIDDEN), HIDDEN, HIDDEN)
    b2 = jnp.full((1, HIDDEN), 0.1, jnp.float32)
    wq = xavier_uniform(k3, (1, HIDDEN), HIDDEN, 1)
    bq = jnp.full((1, 1), 0.1, jnp.float32)

    q = soft_q_forward(x, w1, b1, w2, b2, wq, bq)
    q = jax.block_until_ready(q)

    # Pure-JAX f32 reference; kernel uses bf16 MXU operands with f32
    # accumulation, so the tolerance is relaxed accordingly.
    ref = jnp.maximum(x @ w1 + b1, 0.0)
    ref = jnp.maximum(ref @ w2 + b2, 0.0)
    ref = ref @ wq.T + bq
    np.testing.assert_allclose(np.asarray(q), np.asarray(ref), rtol=3e-2, atol=3e-2)

    print("KERNEL_OK")
</pallas_src>

<mosaic_0001>
module attributes {stable_mosaic.version = 11 : i64} {
  func.func @soft_q_kernel(%arg0: i32, %arg1: memref<8x16xbf16, #tpu.memory_space<vmem>>, %arg2: memref<16x256xbf16, #tpu.memory_space<vmem>>, %arg3: memref<1x256xf32, #tpu.memory_space<vmem>>, %arg4: memref<256x256xbf16, #tpu.memory_space<vmem>>, %arg5: memref<1x256xf32, #tpu.memory_space<vmem>>, %arg6: memref<1x256xf32, #tpu.memory_space<vmem>>, %arg7: memref<1x1xf32, #tpu.memory_space<smem>>, %arg8: memref<1x8xf32, #tpu.memory_space<vmem>>) attributes {dimension_semantics = [#tpu.dimension_semantics<parallel>], iteration_bounds = array<i64: 1>, scalar_prefetch = 0 : i64, scratch_operands = 0 : i64, tpu.core_type = #tpu.core_type<tc>, window_params = [{transform_indices = @transform_0, window_bounds = array<i64: 8, 16>}, {pipeline_mode = #tpu.pipeline_mode<synchronous>, transform_indices = @transform_1, window_bounds = array<i64: 16, 256>}, {pipeline_mode = #tpu.pipeline_mode<synchronous>, transform_indices = @transform_2, window_bounds = array<i64: 1, 256>}, {pipeline_mode = #tpu.pipeline_mode<synchronous>, transform_indices = @transform_3, window_bounds = array<i64: 256, 256>}, {pipeline_mode = #tpu.pipeline_mode<synchronous>, transform_indices = @transform_4, window_bounds = array<i64: 1, 256>}, {pipeline_mode = #tpu.pipeline_mode<synchronous>, transform_indices = @transform_5, window_bounds = array<i64: 1, 256>}, {transform_indices = @transform_6, window_bounds = array<i64: 1, 1>}, {transform_indices = @transform_7, window_bounds = array<i64: 1, 8>}]} {
    %c0 = arith.constant 0 : index
    %c0_0 = arith.constant 0 : index
    %0 = vector.load %arg1[%c0, %c0_0] : memref<8x16xbf16, #tpu.memory_space<vmem>>, vector<8x16xbf16>
    %c0_1 = arith.constant 0 : index
    %c0_2 = arith.constant 0 : index
    %1 = vector.load %arg2[%c0_1, %c0_2] : memref<16x256xbf16, #tpu.memory_space<vmem>>, vector<16x256xbf16>
    %cst = arith.constant dense<0.000000e+00> : vector<8x256xf32>
    %2 = tpu.matmul %0, %1, %cst {dimension_numbers = #tpu.dot_dimension_numbers<[1], [0], [0], [1], [0, 0, 1, 1], [], []>} : vector<8x16xbf16>, vector<16x256xbf16>, vector<8x256xf32> -> vector<8x256xf32>
    %c0_3 = arith.constant 0 : index
    %c0_4 = arith.constant 0 : index
    %3 = vector.load %arg3[%c0_3, %c0_4] : memref<1x256xf32, #tpu.memory_space<vmem>>, vector<1x256xf32>
    %4 = vector.broadcast %3 : vector<1x256xf32> to vector<8x256xf32>
    %5 = arith.addf %2, %4 : vector<8x256xf32>
    %cst_5 = arith.constant 0.000000e+00 : f32
    %6 = vector.broadcast %cst_5 : f32 to vector<8x256xf32>
    %7 = arith.maximumf %5, %6 : vector<8x256xf32>
    %8 = arith.truncf %7 : vector<8x256xf32> to vector<8x256xbf16>
    %c0_6 = arith.constant 0 : index
    %c0_7 = arith.constant 0 : index
    %9 = vector.load %arg4[%c0_6, %c0_7] : memref<256x256xbf16, #tpu.memory_space<vmem>>, vector<256x256xbf16>
    %cst_8 = arith.constant dense<0.000000e+00> : vector<8x256xf32>
    %10 = tpu.matmul %8, %9, %cst_8 {dimension_numbers = #tpu.dot_dimension_numbers<[1], [0], [0], [1], [0, 0, 1, 1], [], []>} : vector<8x256xbf16>, vector<256x256xbf16>, vector<8x256xf32> -> vector<8x256xf32>
    %c0_9 = arith.constant 0 : index
    %c0_10 = arith.constant 0 : index
    %11 = vector.load %arg5[%c0_9, %c0_10] : memref<1x256xf32, #tpu.memory_space<vmem>>, vector<1x256xf32>
    %12 = vector.broadcast %11 : vector<1x256xf32> to vector<8x256xf32>
    %13 = arith.addf %10, %12 : vector<8x256xf32>
    %cst_11 = arith.constant 0.000000e+00 : f32
    %14 = vector.broadcast %cst_11 : f32 to vector<8x256xf32>
    %15 = arith.maximumf %13, %14 : vector<8x256xf32>
    %c0_12 = arith.constant 0 : index
    %c0_13 = arith.constant 0 : index
    %16 = vector.load %arg6[%c0_12, %c0_13] : memref<1x256xf32, #tpu.memory_space<vmem>>, vector<1x256xf32>
    %17 = vector.broadcast %16 : vector<1x256xf32> to vector<8x256xf32>
    %18 = arith.mulf %15, %17 : vector<8x256xf32>
    %cst_14 = arith.constant dense<0.000000e+00> : vector<8xf32>
    %19 = vector.multi_reduction <add>, %18, %cst_14 [1] : vector<8x256xf32> to vector<8xf32>
    %20 = vector.shape_cast %19 : vector<8xf32> to vector<8x1xf32>
    %c0_15 = arith.constant 0 : index
    %c0_16 = arith.constant 0 : index
    %21 = memref.load %arg7[%c0_15, %c0_16] : memref<1x1xf32, #tpu.memory_space<smem>>
    %22 = vector.broadcast %21 : f32 to vector<8x1xf32>
    %23 = arith.addf %20, %22 : vector<8x1xf32>
    %24 = tpu.transpose %23, [1, 0] : vector<8x1xf32> -> vector<1x8xf32>
    %c0_17 = arith.constant 0 : index
    %c0_18 = arith.constant 0 : index
    %25 = vector.load %arg8[%c0_17, %c0_18] : memref<1x8xf32, #tpu.memory_space<vmem>>, vector<1x8xf32>
    tpu.vector_store %arg8[%c0_17, %c0_18], %24 {strides = array<i32>} : memref<1x8xf32, #tpu.memory_space<vmem>>, vector<1x8xf32>,
    return
  }
  func.func @transform_0(%arg0: i32) -> (i32, i32) {
    %c0_i32 = arith.constant 0 : i32
    %c0_i32_0 = arith.constant 0 : i32
    return %arg0, %c0_i32 : i32, i32
  }
  func.func @transform_1(%arg0: i32) -> (i32, i32) {
    %c0_i32 = arith.constant 0 : i32
    %c0_i32_0 = arith.constant 0 : i32
    %c0_i32_1 = arith.constant 0 : i32
    return %c0_i32, %c0_i32_0 : i32, i32
  }
  func.func @transform_2(%arg0: i32) -> (i32, i32) {
    %c0_i32 = arith.constant 0 : i32
    %c0_i32_0 = arith.constant 0 : i32
    %c0_i32_1 = arith.constant 0 : i32
    return %c0_i32, %c0_i32_0 : i32, i32
  }
  func.func @transform_3(%arg0: i32) -> (i32, i32) {
    %c0_i32 = arith.constant 0 : i32
    %c0_i32_0 = arith.constant 0 : i32
    %c0_i32_1 = arith.constant 0 : i32
    return %c0_i32, %c0_i32_0 : i32, i32
  }
  func.func @transform_4(%arg0: i32) -> (i32, i32) {
    %c0_i32 = arith.constant 0 : i32
    %c0_i32_0 = arith.constant 0 : i32
    %c0_i32_1 = arith.constant 0 : i32
    return %c0_i32, %c0_i32_0 : i32, i32
  }
  func.func @transform_5(%arg0: i32) -> (i32, i32) {
    %c0_i32 = arith.constant 0 : i32
    %c0_i32_0 = arith.constant 0 : i32
    %c0_i32_1 = arith.constant 0 : i32
    return %c0_i32, %c0_i32_0 : i32, i32
  }
  func.func @transform_6(%arg0: i32) -> (i32, i32) {
    %c0_i32 = arith.constant 0 : i32
    %c0_i32_0 = arith.constant 0 : i32
    %c0_i32_1 = arith.constant 0 : i32
    return %c0_i32, %c0_i32_0 : i32, i32
  }
  func.func @transform_7(%arg0: i32) -> (i32, i32) {
    %c0_i32 = arith.constant 0 : i32
    %c0_i32_0 = arith.constant 0 : i32
    return %c0_i32, %arg0 : i32, i32
  }
}

</mosaic_0001>

<llo_original>
// kernel: tpu_custom_call.1
$region0: #{tpu_custom_call.1}
  #allocation0 [shape = 'u32[]', space=smem, size = 0x4, offset = 0x4, fixed_abs, tag = 'smem constant byte address 0x4 - core index']
  #allocation1 [shape = 'u32[144,128]{1,0:T(1,128)}', space=vmem, size = 0x12000, scoped, tag = 'internal scratch']
  #allocation2 [shape = 'f32[1,1]{1,0:T(1,128)S(6)}', space=smem, size = 0x200, scoped, tag = 'scoped memory for tpu_custom_call.1']
  %s0 = inlined_call_operand.hbm [shape: bf16[8,16], index: 0, kind: input, shape index: {}]
  %s1 = inlined_call_operand.hbm [shape: bf16[16,256], index: 1, kind: input, shape index: {}]
  %s2 = inlined_call_operand.vmem [shape: f32[1,256], index: 2, kind: input, shape index: {}]
  %s3 = inlined_call_operand.hbm [shape: bf16[256,256], index: 3, kind: input, shape index: {}]
  %s4 = inlined_call_operand.vmem [shape: f32[1,256], index: 4, kind: input, shape index: {}]
  %s5 = inlined_call_operand.vmem [shape: f32[1,256], index: 5, kind: input, shape index: {}]
  %s6 = inlined_call_operand.<no memory space> [shape: f32[1,1], index: 6, kind: input, shape index: {}]
  %s7 = inlined_call_operand.hbm [shape: f32[1,8], index: 7, kind: output, shape index: {}]
  %s8 = sld [smem:[#allocation0]]
  $region50: #{tpu_custom_call.1} parent=0
    _
  %s10 = ssub.s32 1, %s8
  %s11 = scalar_select 0, %s10, %s8
  %12 = sst [smem:[#allocation2]] %s6
  $region1: #{tpu_custom_call.1} parent=0
    #allocation3 [shape = 'u8[2048]{0}', space=vmem, size = 0x800, scoped, tag = 'input window, operand 0, single buffered']
    #allocation4 [shape = 's32[1]{0}', space=sflag, size = 0x4, scoped, tag = 'scoped memory for tpu_custom_call.1']
    #allocation5 [shape = 's32[1]{0}', space=sflag, size = 0x4, scoped, tag = 'scoped memory for tpu_custom_call.1']
    #allocation6 [shape = 'u8[8192]{0}', space=vmem, size = 0x2000, scoped, tag = 'input window, operand 1, single buffered']
    #allocation7 [shape = 's32[1]{0}', space=sflag, size = 0x4, scoped, tag = 'scoped memory for tpu_custom_call.1']
    #allocation8 [shape = 'u8[131072]{0}', space=vmem, size = 0x20000, scoped, tag = 'input window, operand 3, single buffered']
    #allocation9 [shape = 'u8[512]{0}', space=vmem, size = 0x400, scoped, tag = 'output window, operand 0, single buffered']
    %13 = vsyncpa [#allocation4], 0
    %14 = vsyncpa [#allocation7], 0
    %15 = vsyncpa [#allocation5], 0
    // Predicated region
    $region2: #{tpu_custom_call.1} parent=1 // pred_check
      _
    $region3: #{tpu_custom_call.1} parent=1 // pred_check_branch
      %17 = sbr.rel (0) target = $region5
    $region4: #{tpu_custom_call.1} parent=1 // pred_region
      %s19 = ssub.s32 64, 64
      %20 = vsyncadd [#allocation4], %s19
      %s22 = sshll.u32 [#allocation3], 4
      %s23 = int_to_ptr.vmem [resolvable:$true] %s22
      %25 = dma.hbm_to_vmem [thread:$0]  %s0, 64, %s23, [#allocation4]
    $region5: #{tpu_custom_call.1} parent=1 // pred_fallthru
      _
    // Predicated region
    $region6: #{tpu_custom_call.1} parent=1 // pred_check
      _
    $region7: #{tpu_custom_call.1} parent=1 // pred_check_branch
      %27 = sbr.rel (0) target = $region9
    $region8: #{tpu_custom_call.1} parent=1 // pred_region
      %s29 = ssub.s32 256, 256
      %30 = vsyncadd [#allocation7], %s29
      %s31 = sshll.u32 [#allocation6], 4
      %s32 = int_to_ptr.vmem [resolvable:$true] %s31
      %37 = dma.hbm_to_vmem [thread:$0]  %s1, 256, %s32, [#allocation7], 128, 128, 8
    $region9: #{tpu_custom_call.1} parent=1 // pred_fallthru
      _
    // Predicated region
    $region10: #{tpu_custom_call.1} parent=1 // pred_check
      _
    $region11: #{tpu_custom_call.1} parent=1 // pred_check_branch
      %39 = sbr.rel (0) target = $region13
    $region12: #{tpu_custom_call.1} parent=1 // pred_region
      _
    $region13: #{tpu_custom_call.1} parent=1 // pred_fallthru
      _
    // Predicated region
    $region14: #{tpu_custom_call.1} parent=1 // pred_check
      _
    $region15: #{tpu_custom_call.1} parent=1 // pred_check_branch
      %41 = sbr.rel (0) target = $region17
    $region16: #{tpu_custom_call.1} parent=1 // pred_region
      %s43 = ssub.s32 4096, 4096
      %44 = vsyncadd [#allocation7], %s43
      %s45 = sshll.u32 [#allocation8], 4
      %s46 = int_to_ptr.vmem [resolvable:$true] %s45
      %51 = dma.hbm_to_vmem [thread:$0]  %s3, 4096, %s46, [#allocation7], 128, 128, 8
    $region17: #{tpu_custom_call.1} parent=1 // pred_fallthru
      _
    // Predicated region
    $region18: #{tpu_custom_call.1} parent=1 // pred_check
      _
    $region19: #{tpu_custom_call.1} parent=1 // pred_check_branch
      %53 = sbr.rel (0) target = $region21
    $region20: #{tpu_custom_call.1} parent=1 // pred_region
      _
    $region21: #{tpu_custom_call.1} parent=1 // pred_fallthru
      _
    // Predicated region
    $region22: #{tpu_custom_call.1} parent=1 // pred_check
      _
    $region23: #{tpu_custom_call.1} parent=1 // pred_check_branch
      %55 = sbr.rel (0) target = $region25
    $region24: #{tpu_custom_call.1} parent=1 // pred_region
      _
    $region25: #{tpu_custom_call.1} parent=1 // pred_fallthru
      _
    // Predicated region
    $region26: #{tpu_custom_call.1} parent=1 // pred_check
      _
    $region27: #{tpu_custom_call.1} parent=1 // pred_check_branch
      %57 = sbr.rel (0) target = $region29
    $region28: #{tpu_custom_call.1} parent=1 // pred_region
      _
    $region29: #{tpu_custom_call.1} parent=1 // pred_fallthru
      _
    // Predicated region
    $region30: #{tpu_custom_call.1} parent=1 // pred_check
      _
    $region31: #{tpu_custom_call.1} parent=1 // pred_check_branch
      %59 = sbr.rel (0) target = $region33
    $region32: #{tpu_custom_call.1} parent=1 // pred_region
      %60 = dma.done [#allocation4], 64
    $region33: #{tpu_custom_call.1} parent=1 // pred_fallthru
      _
    // Predicated region
    $region34: #{tpu_custom_call.1} parent=1 // pred_check
      _
    $region35: #{tpu_custom_call.1} parent=1 // pred_check_branch
      %62 = sbr.rel (0) target = $region37
    $region36: #{tpu_custom_call.1} parent=1 // pred_region
      %63 = dma.done [#allocation7], 256
    $region37: #{tpu_custom_call.1} parent=1 // pred_fallthru
      _
    // Predicated region
    $region38: #{tpu_custom_call.1} parent=1 // pred_check
      _
    $region39: #{tpu_custom_call.1} parent=1 // pred_check_branch
      %65 = sbr.rel (0) target = $region41
    $region40: #{tpu_custom_call.1} parent=1 // pred_region
      %66 = dma.done [#allocation7], 4096
    $region41: #{tpu_custom_call.1} parent=1 // pred_fallthru
      _
    %v68 = vld [vmem:[#allocation3] sm:$0xf]
    %v69 = vld [vmem:[#allocation6] sm:$0xff]
    %v70 = vld [vmem:[#allocation6 + $0x8] sm:$0xff]
    %v71 = vld [vmem:[%s2] sm:$0x3]
    %v73 = vlaneseq
    %v74 = vshrl.u32 %v73, 7
    %v75 = vsub.s32 0, %v74
    %v76 = vrot.slane %v71, %v75
    %v77 = vlaneseq
    %v78 = vshrl.u32 %v77, 7
    %v79 = vsub.s32 1, %v78
    %v80 = vrot.slane %v71, %v79
    %v85 = vunpack.c.l.b16 %v69
    %v86 = vunpack.c.h.b16 %v69
    %v87 = vunpack.c.l.b16 %v70
    %v88 = vunpack.c.h.b16 %v70
    %v89 = vpack.c.b16 %v87, %v85
    %v90 = vpack.c.b16 %v88, %v86
    %vm93 = vcmask 130048
    %v95 = vsel %vm93, %v68, 0
    %97 = vmatprep.subr.bf16.mxu0 %v90
    %98 = vmatpush1.bf16.msra.mxu0 %v89
    %99 = vmatprep.subr.bf16.mxu0 0
    %100 = vmatpush1.bf16.msra.mxu0 0
    %101 = vmatprep.subr.bf16.mxu0 0
    %102 = vmatpush1.bf16.msra.mxu0 0
    %103 = vmatprep.subr.bf16.mxu0 0
    %104 = vmatpush1.bf16.msra.mxu0 0
    %105 = vmatprep.subr.bf16.mxu0 0
    %106 = vmatpush1.bf16.msra.mxu0 0
    %107 = vmatprep.subr.bf16.mxu0 0
    %108 = vmatpush1.bf16.msra.mxu0 0
    %109 = vmatprep.subr.bf16.mxu0 0
    %110 = vmatpush1.bf16.msra.mxu0 0
    %111 = vmatprep.subr.bf16.mxu0 0
    %112 = vmatpush1.bf16.msra.mxu0 0
    %113 = vmatprep.subr.bf16.mxu0 0
    %114 = vmatpush1.bf16.msra.mxu0 0
    %115 = vmatprep.subr.bf16.mxu0 0
    %116 = vmatpush1.bf16.msra.mxu0 0
    %117 = vmatprep.subr.bf16.mxu0 0
    %118 = vmatpush1.bf16.msra.mxu0 0
    %119 = vmatprep.subr.bf16.mxu0 0
    %120 = vmatpush1.bf16.msra.mxu0 0
    %121 = vmatprep.subr.bf16.mxu0 0
    %122 = vmatpush1.bf16.msra.mxu0 0
    %123 = vmatprep.subr.bf16.mxu0 0
    %124 = vmatpush1.bf16.msra.mxu0 0
    %125 = vmatprep.subr.bf16.mxu0 0
    %126 = vmatpush1.bf16.msra.mxu0 0
    %127 = vmatprep.subr.bf16.mxu0 0
    %128 = vmatpush1.bf16.msra.mxu0 0
    %129 = vmatprep.mubr.bf16.mxu0 0
    %130 = vmatmul.mubr.bf16.gmra.mrb[0].mxu0 %v95
    %v131 = vpop.f32.mrb[0].mxu0
    %v132 = vadd.f32 %v76, %v131
    %v133 = vpop.f32.mrb[0].mxu0
    %v134 = vadd.f32 %v80, %v133
    %v135 = vpop.f32.mrb[0].mxu0
    %v136 = vpop.f32.mrb[0].mxu0
    %137 = vdwg.mxu0
    %v138 = vmax.f32 %v132, 0.0
    %v139 = vmax.f32 %v134, 0.0
    %v140 = vpack.c.bf16 %v138, %v138
    %v141 = vpack.c.bf16 %v139, %v139
    %v142 = vld [vmem:[#allocation8] sm:$0xff]
    %v143 = vld [vmem:[#allocation8 + $0x8] sm:$0xff]
    %v144 = vld [vmem:[#allocation8 + $0x10] sm:$0xff]
    %v145 = vld [vmem:[#allocation8 + $0x18] sm:$0xff]
    %v146 = vld [vmem:[#allocation8 + $0x20] sm:$0xff]
    %v147 = vld [vmem:[#allocation8 + $0x28] sm:$0xff]
    %v148 = vld [vmem:[#allocation8 + $0x30] sm:$0xff]
    %v149 = vld [vmem:[#allocation8 + $0x38] sm:$0xff]
    %v150 = vld [vmem:[#allocation8 + $0x40] sm:$0xff]
    %v151 = vld [vmem:[#allocation8 + $0x48] sm:$0xff]
    %v152 = vld [vmem:[#allocation8 + $0x50] sm:$0xff]
    %v153 = vld [vmem:[#allocation8 + $0x58] sm:$0xff]
    %v154 = vld [vmem:[#allocation8 + $0x60] sm:$0xff]
    %v155 = vld [vmem:[#allocation8 + $0x68] sm:$0xff]
    %v156 = vld [vmem:[#allocation8 + $0x70] sm:$0xff]
    %v157 = vld [vmem:[#allocation8 + $0x78] sm:$0xff]
    %v158 = vld [vmem:[#allocation8 + $0x80] sm:$0xff]
    %v159 = vld [vmem:[#allocation8 + $0x88] sm:$0xff]
    %v160 = vld [vmem:[#allocation8 + $0x90] sm:$0xff]
    %v161 = vld [vmem:[#allocation8 + $0x98] sm:$0xff]
    %v162 = vld [vmem:[#allocation8 + $0xa0] sm:$0xff]
    %v163 = vld [vmem:[#allocation8 + $0xa8] sm:$0xff]
    %v164 = vld [vmem:[#allocation8 + $0xb0] sm:$0xff]
    %v165 = vld [vmem:[#allocation8 + $0xb8] sm:$0xff]
    %v166 = vld [vmem:[#allocation8 + $0xc0] sm:$0xff]
    %v167 = vld [vmem:[#allocation8 + $0xc8] sm:$0xff]
    %v168 = vld [vmem:[#allocation8 + $0xd0] sm:$0xff]
    %v169 = vld [vmem:[#allocation8 + $0xd8] sm:$0xff]
    %v170 = vld [vmem:[#allocation8 + $0xe0] sm:$0xff]
    %v171 = vld [vmem:[#allocation8 + $0xe8] sm:$0xff]
    %v172 = vld [vmem:[#allocation8 + $0xf0] sm:$0xff]
    %v173 = vld [vmem:[#allocation8 + $0xf8] sm:$0xff]
    %v174 = vld [vmem:[%s4] sm:$0x3]
    %v176 = vlaneseq
    %v177 = vshrl.u32 %v176, 7
    %v178 = vsub.s32 0, %v177
    %v179 = vrot.slane %v174, %v178
    %v180 = vlaneseq
    %v181 = vshrl.u32 %v180, 7
    %v182 = vsub.s32 1, %v181
    %v183 = vrot.slane %v174, %v182
    %v218 = vunpack.c.l.b16 %v142
    %v219 = vunpack.c.h.b16 %v142
    %v220 = vunpack.c.l.b16 %v143
    %v221 = vunpack.c.h.b16 %v143
    %v222 = vunpack.c.l.b16 %v144
    %v223 = vunpack.c.h.b16 %v144
    %v224 = vunpack.c.l.b16 %v145
    %v225 = vunpack.c.h.b16 %v145
    %v226 = vunpack.c.l.b16 %v146
    %v227 = vunpack.c.h.b16 %v146
    %v228 = vunpack.c.l.b16 %v147
    %v229 = vunpack.c.h.b16 %v147
    %v230 = vunpack.c.l.b16 %v148
    %v231 = vunpack.c.h.b16 %v148
    %v232 = vunpack.c.l.b16 %v149
    %v233 = vunpack.c.h.b16 %v149
    %v234 = vunpack.c.l.b16 %v150
    %v235 = vunpack.c.h.b16 %v150
    %v236 = vunpack.c.l.b16 %v151
    %v237 = vunpack.c.h.b16 %v151
    %v238 = vunpack.c.l.b16 %v152
    %v239 = vunpack.c.h.b16 %v152
    %v240 = vunpack.c.l.b16 %v153
    %v241 = vunpack.c.h.b16 %v153
    %v242 = vunpack.c.l.b16 %v154
    %v243 = vunpack.c.h.b16 %v154
    %v244 = vunpack.c.l.b16 %v155
    %v245 = vunpack.c.h.b16 %v155
    %v246 = vunpack.c.l.b16 %v156
    %v247 = vunpack.c.h.b16 %v156
    %v248 = vunpack.c.l.b16 %v157
    %v249 = vunpack.c.h.b16 %v157
    %v250 = vunpack.c.l.b16 %v158
    %v251 = vunpack.c.h.b16 %v158
    %v252 = vunpack.c.l.b16 %v159
    %v253 = vunpack.c.h.b16 %v159
    %v254 = vunpack.c.l.b16 %v160
    %v255 = vunpack.c.h.b16 %v160
    %v256 = vunpack.c.l.b16 %v161
    %v257 = vunpack.c.h.b16 %v161
    %v258 = vunpack.c.l.b16 %v162
    %v259 = vunpack.c.h.b16 %v162
    %v260 = vunpack.c.l.b16 %v163
    %v261 = vunpack.c.h.b16 %v163
    %v262 = vunpack.c.l.b16 %v164
    %v263 = vunpack.c.h.b16 %v164
    %v264 = vunpack.c.l.b16 %v165
    %v265 = vunpack.c.h.b16 %v165
    %v266 = vunpack.c.l.b16 %v166
    %v267 = vunpack.c.h.b16 %v166
    %v268 = vunpack.c.l.b16 %v167
    %v269 = vunpack.c.h.b16 %v167
    %v270 = vunpack.c.l.b16 %v168
    %v271 = vunpack.c.h.b16 %v168
    %v272 = vunpack.c.l.b16 %v169
    %v273 = vunpack.c.h.b16 %v169
    %v274 = vunpack.c.l.b16 %v170
    %v275 = vunpack.c.h.b16 %v170
    %v276 = vunpack.c.l.b16 %v171
    %v277 = vunpack.c.h.b16 %v171
    %v278 = vunpack.c.l.b16 %v172
    %v279 = vunpack.c.h.b16 %v172
    %v280 = vunpack.c.l.b16 %v173
    %v281 = vunpack.c.h.b16 %v173
    %v282 = vpack.c.b16 %v220, %v218
    %v283 = vpack.c.b16 %v221, %v219
    %v284 = vpack.c.b16 %v224, %v222
    %v285 = vpack.c.b16 %v225, %v223
    %v286 = vpack.c.b16 %v228, %v226
    %v287 = vpack.c.b16 %v229, %v227
    %v288 = vpack.c.b16 %v232, %v230
    %v289 = vpack.c.b16 %v233, %v231
    %v290 = vpack.c.b16 %v236, %v234
    %v291 = vpack.c.b16 %v237, %v235
    %v292 = vpack.c.b16 %v240, %v238
    %v293 = vpack.c.b16 %v241, %v239
    %v294 = vpack.c.b16 %v244, %v242
    %v295 = vpack.c.b16 %v245, %v243
    %v296 = vpack.c.b16 %v248, %v246
    %v297 = vpack.c.b16 %v249, %v247
    %v298 = vpack.c.b16 %v252, %v250
    %v299 = vpack.c.b16 %v253, %v251
    %v300 = vpack.c.b16 %v256, %v254
    %v301 = vpack.c.b16 %v257, %v255
    %v302 = vpack.c.b16 %v260, %v258
    %v303 = vpack.c.b16 %v261, %v259
    %v304 = vpack.c.b16 %v264, %v262
    %v305 = vpack.c.b16 %v265, %v263
    %v306 = vpack.c.b16 %v268, %v266
    %v307 = vpack.c.b16 %v269, %v267
    %v308 = vpack.c.b16 %v272, %v270
    %v309 = vpack.c.b16 %v273, %v271
    %v310 = vpack.c.b16 %v276, %v274
    %v311 = vpack.c.b16 %v277, %v275
    %v312 = vpack.c.b16 %v280, %v278
    %v313 = vpack.c.b16 %v281, %v279
    %346 = vmatprep.subr.bf16.mxu0 %v283
    %347 = vmatpush1.bf16.msra.mxu0 %v282
    %348 = vmatprep.subr.bf16.mxu0 %v285
    %349 = vmatpush1.bf16.msra.mxu0 %v284
    %350 = vmatprep.subr.bf16.mxu0 %v287
    %351 = vmatpush1.bf16.msra.mxu0 %v286
    %352 = vmatprep.subr.bf16.mxu0 %v289
    %353 = vmatpush1.bf16.msra.mxu0 %v288
    %354 = vmatprep.subr.bf16.mxu0 %v291
    %355 = vmatpush1.bf16.msra.mxu0 %v290
    %356 = vmatprep.subr.bf16.mxu0 %v293
    %357 = vmatpush1.bf16.msra.mxu0 %v292
    %358 = vmatprep.subr.bf16.mxu0 %v295
    %359 = vmatpush1.bf16.msra.mxu0 %v294
    %360 = vmatprep.subr.bf16.mxu0 %v297
    %361 = vmatpush1.bf16.msra.mxu0 %v296
    %362 = vmatprep.subr.bf16.mxu0 %v299
    %363 = vmatpush1.bf16.msra.mxu0 %v298
    %364 = vmatprep.subr.bf16.mxu0 %v301
    %365 = vmatpush1.bf16.msra.mxu0 %v300
    %366 = vmatprep.subr.bf16.mxu0 %v303
    %367 = vmatpush1.bf16.msra.mxu0 %v302
    %368 = vmatprep.subr.bf16.mxu0 %v305
    %369 = vmatpush1.bf16.msra.mxu0 %v304
    %370 = vmatprep.subr.bf16.mxu0 %v307
    %371 = vmatpush1.bf16.msra.mxu0 %v306
    %372 = vmatprep.subr.bf16.mxu0 %v309
    %373 = vmatpush1.bf16.msra.mxu0 %v308
    %374 = vmatprep.subr.bf16.mxu0 %v311
    %375 = vmatpush1.bf16.msra.mxu0 %v310
    %376 = vmatprep.subr.bf16.mxu0 %v313
    %377 = vmatpush1.bf16.msra.mxu0 %v312
    %378 = vmatprep.mubr.bf16.mxu0 %v141
    %379 = vmatmul.mubr.bf16.gmra.mrb[0].mxu0 %v140
    %v380 = vpop.f32.mrb[0].mxu0
    %v381 = vadd.f32 %v179, %v380
    %v382 = vpop.f32.mrb[0].mxu0
    %v383 = vadd.f32 %v183, %v382
    %v384 = vpop.f32.mrb[0].mxu0
    %v385 = vpop.f32.mrb[0].mxu0
    %386 = vdwg.mxu0
    %v387 = vmax.f32 %v381, 0.0
    %v388 = vmax.f32 %v383, 0.0
    %v389 = vld [vmem:[%s5] sm:$0x3]
    %v391 = vlaneseq
    %v392 = vshrl.u32 %v391, 7
    %v393 = vsub.s32 0, %v392
    %v394 = vrot.slane %v389, %v393
    %v395 = vlaneseq
    %v396 = vshrl.u32 %v395, 7
    %v397 = vsub.s32 1, %v396
    %v398 = vrot.slane %v389, %v397
    %v401 = vmul.f32 %v387, %v394
    %v402 = vmul.f32 %v388, %v398
    %v403 = vadd.f32 %v401, %v402
    %404 = vadd.xlane.f32.xlu0 %v403
    %v405 = vpop.xlane.xlu0 %404
    %s406 = sld [smem:[#allocation2]]
    %v407 = vstv %s406
    %v408 = vadd.f32 %v405, %v407
    %409 = vxpose.xlu0.b32.start [1/16] %v408, 128
    %410 = vxpose.xlu0.b32.cont [2/16] 0.0, 128
    %411 = vxpose.xlu0.b32.cont [3/16] 0.0, 128
    %412 = vxpose.xlu0.b32.cont [4/16] 0.0, 128
    %413 = vxpose.xlu0.b32.cont [5/16] 0.0, 128
    %414 = vxpose.xlu0.b32.cont [6/16] 0.0, 128
    %415 = vxpose.xlu0.b32.cont [7/16] 0.0, 128
    %416 = vxpose.xlu0.b32.cont [8/16] 0.0, 128
    %417 = vxpose.xlu0.b32.cont [9/16] 0.0, 128
    %418 = vxpose.xlu0.b32.cont [10/16] 0.0, 128
    %419 = vxpose.xlu0.b32.cont [11/16] 0.0, 128
    %420 = vxpose.xlu0.b32.cont [12/16] 0.0, 128
    %421 = vxpose.xlu0.b32.cont [13/16] 0.0, 128
    %422 = vxpose.xlu0.b32.cont [14/16] 0.0, 128
    %423 = vxpose.xlu0.b32.cont [15/16] 0.0, 128
    %424 = vxpose.xlu0.b32.end [16/16] 0.0, 128
    %v425 = vpop.trf.xlu0
    %v426 = vpop.trf.xlu0
    %v427 = vpop.trf.xlu0
    %v428 = vpop.trf.xlu0
    %v429 = vpop.trf.xlu0
    %v430 = vpop.trf.xlu0
    %v431 = vpop.trf.xlu0
    %v432 = vpop.trf.xlu0
    %v433 = vpop.trf.xlu0
    %v434 = vpop.trf.xlu0
    %v435 = vpop.trf.xlu0
    %v436 = vpop.trf.xlu0
    %v437 = vpop.trf.xlu0
    %v438 = vpop.trf.xlu0
    %v439 = vpop.trf.xlu0
    %v440 = vpop.trf.xlu0
    %vm441 = vcmask 57344
    %442 = vst.msk [vmem:[#allocation9] sm:$0x1] %vm441, %v425
    // Predicated region
    $region42: #{tpu_custom_call.1} parent=1 // pred_check
      _
    $region43: #{tpu_custom_call.1} parent=1 // pred_check_branch
      %444 = sbr.rel (0) target = $region45
    $region44: #{tpu_custom_call.1} parent=1 // pred_region
      %s446 = ssub.s32 16, 16
      %447 = vsyncadd [#allocation5], %s446
      %s449 = sshll.u32 [#allocation9], 4
      %s450 = int_to_ptr.vmem [resolvable:$true] %s449
      %452 = dma.vmem_to_hbm [thread:$0]  %s450, 16, %s7, [#allocation5]
    $region45: #{tpu_custom_call.1} parent=1 // pred_fallthru
      _
    // Predicated region
    $region46: #{tpu_custom_call.1} parent=1 // pred_check
      _
    $region47: #{tpu_custom_call.1} parent=1 // pred_check_branch
      %454 = sbr.rel (0) target = $region49
    $region48: #{tpu_custom_call.1} parent=1 // pred_region
      %455 = dma.done [#allocation5], 16
    $region49: #{tpu_custom_call.1} parent=1 // pred_fallthru
      _
    %456 = vsyncpa [#allocation4], 1
    %457 = vsyncpa [#allocation7], 1
    %458 = vsyncpa [#allocation5], 1

</llo_original>
